<compile_context>
chip_gen: v7x
topology: tpu7x:2x2x1
jax: 0.10.0
libtpu: 0.0.40
codegen_flags: <defaults>
</compile_context>

<pallas_src>
import functools

import jax
import jax.numpy as jnp
from jax.experimental import pallas as pl
from jax.experimental.pallas import tpu as pltpu


def mlp_kernel(w1_ref, w2_ref, xt_ref, ot_ref):
    """ot = sigmoid(W2 @ sigmoid(W1 @ xt)); xt is (in, B_block), ot is (out, B_block)."""
    h = jax.nn.sigmoid(
        jnp.dot(w1_ref[...], xt_ref[...], preferred_element_type=jnp.float32))
    y = jax.nn.sigmoid(
        jnp.dot(w2_ref[...], h, preferred_element_type=jnp.float32))
    ot_ref[...] = y.astype(ot_ref.dtype)


@functools.partial(jax.jit, static_argnames=("block_b",))
def model_forward(x, w1, w2, block_b=256):
    """x: (B, in_features); w1, w2: PyTorch layout (out, in). Returns (B, out)."""
    B, in_f = x.shape
    hid = w1.shape[0]
    out_f = w2.shape[0]

    # Batch -> lane axis. Activation transpose only (tiny, fused under jit);
    # the weights are never transposed or repacked.
    x_t = x.T  # (in_f, B)

    if B > block_b and B % block_b == 0:
        # Batched, gridded path: tile the lane (batch) axis, keep weights resident.
        y_t = pl.pallas_call(
            mlp_kernel,
            out_shape=jax.ShapeDtypeStruct((out_f, B), x.dtype),
            grid=(B // block_b,),
            in_specs=[
                pl.BlockSpec((hid, in_f), lambda i: (0, 0)),      # W1, same block every step
                pl.BlockSpec((out_f, hid), lambda i: (0, 0)),     # W2, same block every step
                pl.BlockSpec((in_f, block_b), lambda i: (0, i)),  # x^T batch block
            ],
            out_specs=pl.BlockSpec((out_f, block_b), lambda i: (0, i)),
            compiler_params=pltpu.CompilerParams(
                # Shards batch blocks across the 2 TensorCores on v7x; no-op on v5e/v6e.
                dimension_semantics=("parallel",)),
        )(w1, w2, x_t)
    else:
        # Small-B path (e.g. the module's original (1, 10) input): whole problem in
        # VMEM, gridless call — no pipelining scaffolding, minimal fixed overhead.
        # TODO(synk): for a strict B=1 production path, a plain fused XLA
        # dot->sigmoid->dot->sigmoid has lower custom-call overhead than any kernel.
        y_t = pl.pallas_call(
            mlp_kernel,
            out_shape=jax.ShapeDtypeStruct((out_f, B), x.dtype),
            in_specs=[pl.BlockSpec(memory_space=pltpu.MemorySpace.VMEM)] * 3,
            out_specs=pl.BlockSpec(memory_space=pltpu.MemorySpace.VMEM),
        )(w1, w2, x_t)

    return y_t.T  # back to (B, out) to match the PyTorch module's output layout


def reference_forward(x, w1, w2):
    v1 = x @ w1.T
    v2 = jax.nn.sigmoid(v1)
    v3 = v2 @ w2.T
    return jax.nn.sigmoid(v3)


if __name__ == "__main__":
    key = jax.random.PRNGKey(0)
    kx, k1, k2, kb = jax.random.split(key, 4)

    # Deterministic Linear(10, 10, bias=False) weights, PyTorch layout (out, in).
    bound = 1.0 / jnp.sqrt(10.0)
    w1 = jax.random.uniform(k1, (10, 10), minval=-bound, maxval=bound, dtype=jnp.float32)
    w2 = jax.random.uniform(k2, (10, 10), minval=-bound, maxval=bound, dtype=jnp.float32)

    # 1) Exact module input shape: x0 = torch.randn(1, 10)  (gridless VMEM path)
    x0 = jax.random.normal(kx, (1, 10), dtype=jnp.float32)
    out0 = jax.block_until_ready(model_forward(x0, w1, w2))
    ref0 = reference_forward(x0, w1, w2)
    assert out0.shape == (1, 10)
    assert jnp.allclose(out0, ref0, atol=1e-5, rtol=1e-5)

    # 2) Batched path (amortizes per-call fixed cost; gridded + parallel over batch)
    xb = jax.random.normal(kb, (1024, 10), dtype=jnp.float32)
    outb = jax.block_until_ready(model_forward(xb, w1, w2))
    refb = reference_forward(xb, w1, w2)
    assert outb.shape == (1024, 10)
    assert jnp.allclose(outb, refb, atol=1e-5, rtol=1e-5)

    print("KERNEL_OK")
</pallas_src>

<mosaic_0001>
module attributes {stable_mosaic.version = 11 : i64} {
  func.func @mlp_kernel(%arg0: memref<10x10xf32, #tpu.memory_space<vmem>>, %arg1: memref<10x10xf32, #tpu.memory_space<vmem>>, %arg2: memref<10x1xf32, #tpu.memory_space<vmem>>, %arg3: memref<10x1xf32, #tpu.memory_space<vmem>>) attributes {dimension_semantics = [], scalar_prefetch = 0 : i64, scratch_operands = 0 : i64, tpu.core_type = #tpu.core_type<tc>} {
    %c0 = arith.constant 0 : index
    %c0_0 = arith.constant 0 : index
    %0 = vector.load %arg0[%c0, %c0_0] : memref<10x10xf32, #tpu.memory_space<vmem>>, vector<10x10xf32>
    %c0_1 = arith.constant 0 : index
    %c0_2 = arith.constant 0 : index
    %1 = vector.load %arg2[%c0_1, %c0_2] : memref<10x1xf32, #tpu.memory_space<vmem>>, vector<10x1xf32>
    %cst = arith.constant dense<0.000000e+00> : vector<10x1xf32>
    %2 = tpu.matmul %0, %1, %cst {dimension_numbers = #tpu.dot_dimension_numbers<[1], [0], [0], [1], [0, 0, 1, 1], [], []>} : vector<10x10xf32>, vector<10x1xf32>, vector<10x1xf32> -> vector<10x1xf32>
    %3 = arith.negf %2 : vector<10x1xf32>
    %4 = math.exp %3 : vector<10x1xf32>
    %cst_3 = arith.constant 1.000000e+00 : f32
    %5 = vector.broadcast %cst_3 : f32 to vector<10x1xf32>
    %6 = arith.addf %5, %4 : vector<10x1xf32>
    %7 = arith.divf %5, %6 : vector<10x1xf32>
    %c0_4 = arith.constant 0 : index
    %c0_5 = arith.constant 0 : index
    %8 = vector.load %arg1[%c0_4, %c0_5] : memref<10x10xf32, #tpu.memory_space<vmem>>, vector<10x10xf32>
    %cst_6 = arith.constant dense<0.000000e+00> : vector<10x1xf32>
    %9 = tpu.matmul %8, %7, %cst_6 {dimension_numbers = #tpu.dot_dimension_numbers<[1], [0], [0], [1], [0, 0, 1, 1], [], []>} : vector<10x10xf32>, vector<10x1xf32>, vector<10x1xf32> -> vector<10x1xf32>
    %10 = arith.negf %9 : vector<10x1xf32>
    %11 = math.exp %10 : vector<10x1xf32>
    %cst_7 = arith.constant 1.000000e+00 : f32
    %12 = vector.broadcast %cst_7 : f32 to vector<10x1xf32>
    %13 = arith.addf %12, %11 : vector<10x1xf32>
    %14 = arith.divf %12, %13 : vector<10x1xf32>
    %c0_8 = arith.constant 0 : index
    %c0_9 = arith.constant 0 : index
    %15 = vector.load %arg3[%c0_8, %c0_9] : memref<10x1xf32, #tpu.memory_space<vmem>>, vector<10x1xf32>
    tpu.vector_store %arg3[%c0_8, %c0_9], %14 {strides = array<i32>} : memref<10x1xf32, #tpu.memory_space<vmem>>, vector<10x1xf32>,
    return
  }
}

</mosaic_0001>

<llo_original>
// kernel: model_forward.1
$region0: #{model_forward.1}
  #allocation0 [shape = 'u32[]', space=smem, size = 0x4, offset = 0x4, fixed_abs, tag = 'smem constant byte address 0x4 - core index']
  #allocation1 [shape = 'u32[144,128]{1,0:T(1,128)}', space=vmem, size = 0x12000, scoped, tag = 'internal scratch']
  %s0 = inlined_call_operand.vmem [shape: f32[10,10], index: 0, kind: input, shape index: {}]
  %s1 = inlined_call_operand.hbm [shape: f32[10,10], index: 1, kind: input, shape index: {}]
  %s2 = inlined_call_operand.vmem [shape: f32[10,1], index: 2, kind: input, shape index: {}]
  %s3 = inlined_call_operand.vmem [shape: f32[10,1], index: 3, kind: output, shape index: {}]
  %s4 = sld [smem:[#allocation0]]
  $region26: #{model_forward.1} parent=0
    _
  %s6 = ssub.s32 1, %s4
  %s7 = scalar_select 0, %s6, %s4
  $region1: #{model_forward.1} parent=0
    #allocation2 [shape = 'u8[8192]{0}', space=vmem, size = 0x2000, scoped, tag = 'input window, operand 1, single buffered']
    #allocation3 [shape = 's32[1]{0}', space=sflag, size = 0x4, scoped, tag = 'scoped memory for model_forward.1']
    %8 = vsyncpa [#allocation3], 0
    // Predicated region
    $region2: #{model_forward.1} parent=1 // pred_check
      _
    $region3: #{model_forward.1} parent=1 // pred_check_branch
      %10 = sbr.rel (0) target = $region5
    $region4: #{model_forward.1} parent=1 // pred_region
      _
    $region5: #{model_forward.1} parent=1 // pred_fallthru
      _
    // Predicated region
    $region6: #{model_forward.1} parent=1 // pred_check
      _
    $region7: #{model_forward.1} parent=1 // pred_check_branch
      %12 = sbr.rel (0) target = $region9
    $region8: #{model_forward.1} parent=1 // pred_region
      %s14 = ssub.s32 256, 256
      %15 = vsyncadd [#allocation3], %s14
      %s16 = sshll.u32 [#allocation2], 4
      %s17 = int_to_ptr.vmem [resolvable:$true] %s16
      %22 = dma.hbm_to_vmem [thread:$0]  %s1, 256, %s17, [#allocation3], 128, 128, 8
    $region9: #{model_forward.1} parent=1 // pred_fallthru
      _
    // Predicated region
    $region10: #{model_forward.1} parent=1 // pred_check
      _
    $region11: #{model_forward.1} parent=1 // pred_check_branch
      %24 = sbr.rel (0) target = $region13
    $region12: #{model_forward.1} parent=1 // pred_region
      _
    $region13: #{model_forward.1} parent=1 // pred_fallthru
      _
    // Predicated region
    $region14: #{model_forward.1} parent=1 // pred_check
      _
    $region15: #{model_forward.1} parent=1 // pred_check_branch
      %26 = sbr.rel (0) target = $region17
    $region16: #{model_forward.1} parent=1 // pred_region
      %27 = dma.done [#allocation3], 256
    $region17: #{model_forward.1} parent=1 // pred_fallthru
      _
    %v28 = vld [vmem:[%s0] sm:$0xff]
    %v29 = vld [vmem:[%s0 + $0x8] sm:$0x3]
    %v30 = vld [vmem:[%s2] sm:$0xff]
    %v31 = vld [vmem:[%s2 + $0x8] sm:$0x3]
    %vm32 = vcmask 80896
    %v34 = vsel %vm32, %v28, 0
    %v37 = vsel %vm32, %v29, 0
    %vm39 = vcmask 1041408
    %v41 = vsel %vm39, %v31, 0
    %43 = vmatprep.subr.mxu0 0.0
    %44 = vmatpush1.msra.mxu0 %v30
    %45 = vmatprep.subr.mxu0 0.0
    %46 = vmatpush1.msra.mxu0 %v41
    %47 = vmatprep.subr.mxu0 0.0
    %48 = vmatpush1.msra.mxu0 0.0
    %49 = vmatprep.subr.mxu0 0.0
    %50 = vmatpush1.msra.mxu0 0.0
    %51 = vmatprep.subr.mxu0 0.0
    %52 = vmatpush1.msra.mxu0 0.0
    %53 = vmatprep.subr.mxu0 0.0
    %54 = vmatpush1.msra.mxu0 0.0
    %55 = vmatprep.subr.mxu0 0.0
    %56 = vmatpush1.msra.mxu0 0.0
    %57 = vmatprep.subr.mxu0 0.0
    %58 = vmatpush1.msra.mxu0 0.0
    %59 = vmatprep.subr.mxu0 0.0
    %60 = vmatpush1.msra.mxu0 0.0
    %61 = vmatprep.subr.mxu0 0.0
    %62 = vmatpush1.msra.mxu0 0.0
    %63 = vmatprep.subr.mxu0 0.0
    %64 = vmatpush1.msra.mxu0 0.0
    %65 = vmatprep.subr.mxu0 0.0
    %66 = vmatpush1.msra.mxu0 0.0
    %67 = vmatprep.subr.mxu0 0.0
    %68 = vmatpush1.msra.mxu0 0.0
    %69 = vmatprep.subr.mxu0 0.0
    %70 = vmatpush1.msra.mxu0 0.0
    %71 = vmatprep.subr.mxu0 0.0
    %72 = vmatpush1.msra.mxu0 0.0
    %73 = vmatprep.subr.mxu0 0.0
    %74 = vmatpush1.msra.mxu0 0.0
    %75 = vmatprep.subr.mxu0 0.0
    %76 = vmatpush1.msra.mxu0 0.0
    %77 = vmatprep.subr.mxu0 0.0
    %78 = vmatpush1.msra.mxu0 0.0
    %79 = vmatprep.subr.mxu0 0.0
    %80 = vmatpush1.msra.mxu0 0.0
    %81 = vmatprep.subr.mxu0 0.0
    %82 = vmatpush1.msra.mxu0 0.0
    %83 = vmatprep.subr.mxu0 0.0
    %84 = vmatpush1.msra.mxu0 0.0
    %85 = vmatprep.subr.mxu0 0.0
    %86 = vmatpush1.msra.mxu0 0.0
    %87 = vmatprep.subr.mxu0 0.0
    %88 = vmatpush1.msra.mxu0 0.0
    %89 = vmatprep.subr.mxu0 0.0
    %90 = vmatpush1.msra.mxu0 0.0
    %91 = vmatprep.subr.mxu0 0.0
    %92 = vmatpush1.msra.mxu0 0.0
    %93 = vmatprep.subr.mxu0 0.0
    %94 = vmatpush1.msra.mxu0 0.0
    %95 = vmatprep.subr.mxu0 0.0
    %96 = vmatpush1.msra.mxu0 0.0
    %97 = vmatprep.subr.mxu0 0.0
    %98 = vmatpush1.msra.mxu0 0.0
    %99 = vmatprep.subr.mxu0 0.0
    %100 = vmatpush1.msra.mxu0 0.0
    %101 = vmatprep.subr.mxu0 0.0
    %102 = vmatpush1.msra.mxu0 0.0
    %103 = vmatprep.subr.mxu0 0.0
    %104 = vmatpush1.msra.mxu0 0.0
    %105 = vmatprep.subr.mxu0 0.0
    %106 = vmatpush1.msra.mxu0 0.0
    %107 = vmatprep.mubr.f32.mxu0 0.0
    %108 = vmatmul.mubr.f32.gmra.mrb[0].mxu0 %v34
    %v109 = vpop.f32.mrb[0].mxu0
    %v110 = vadd.f32 0.0, %v109
    %v111 = vpop.f32.mrb[0].mxu0
    %112 = vmatprep.mubr.f32.mxu0 0.0
    %113 = vmatmul.mubr.f32.gmra.mrb[0].mxu0 %v37
    %v114 = vpop.f32.mrb[0].mxu0
    %v115 = vadd.f32 0.0, %v114
    %v116 = vpop.f32.mrb[0].mxu0
    %117 = vdwg.mxu0
    %v118 = vxor.u32 %v110, 2147483648
    %v119 = vxor.u32 %v115, 2147483648
    %v120 = vmul.f32 %v118, 1.442695
    %v121 = vpow.pop %v120
    %v122 = vmul.f32 %v119, 1.442695
    %v123 = vpow.pop %v122
    %v124 = vadd.f32 %v121, 1.0
    %v125 = vadd.f32 %v123, 1.0
    %v126 = vrcp.pop %v124
    %v127 = vmul.f32 1.0, %v126
    %v128 = vrcp.pop %v125
    %v129 = vmul.f32 1.0, %v128
    %v130 = vld [vmem:[#allocation2] sm:$0xff]
    %v131 = vld [vmem:[#allocation2 + $0x8] sm:$0x3]
    %v133 = vsel %vm32, %v130, 0
    %v136 = vsel %vm32, %v131, 0
    %v139 = vsel %vm39, %v129, 0
    %141 = vmatprep.subr.mxu0 0.0
    %142 = vmatpush1.msra.mxu0 %v127
    %143 = vmatprep.subr.mxu0 0.0
    %144 = vmatpush1.msra.mxu0 %v139
    %145 = vmatprep.subr.mxu0 0.0
    %146 = vmatpush1.msra.mxu0 0.0
    %147 = vmatprep.subr.mxu0 0.0
    %148 = vmatpush1.msra.mxu0 0.0
    %149 = vmatprep.subr.mxu0 0.0
    %150 = vmatpush1.msra.mxu0 0.0
    %151 = vmatprep.subr.mxu0 0.0
    %152 = vmatpush1.msra.mxu0 0.0
    %153 = vmatprep.subr.mxu0 0.0
    %154 = vmatpush1.msra.mxu0 0.0
    %155 = vmatprep.subr.mxu0 0.0
    %156 = vmatpush1.msra.mxu0 0.0
    %157 = vmatprep.subr.mxu0 0.0
    %158 = vmatpush1.msra.mxu0 0.0
    %159 = vmatprep.subr.mxu0 0.0
    %160 = vmatpush1.msra.mxu0 0.0
    %161 = vmatprep.subr.mxu0 0.0
    %162 = vmatpush1.msra.mxu0 0.0
    %163 = vmatprep.subr.mxu0 0.0
    %164 = vmatpush1.msra.mxu0 0.0
    %165 = vmatprep.subr.mxu0 0.0
    %166 = vmatpush1.msra.mxu0 0.0
    %167 = vmatprep.subr.mxu0 0.0
    %168 = vmatpush1.msra.mxu0 0.0
    %169 = vmatprep.subr.mxu0 0.0
    %170 = vmatpush1.msra.mxu0 0.0
    %171 = vmatprep.subr.mxu0 0.0
    %172 = vmatpush1.msra.mxu0 0.0
    %173 = vmatprep.subr.mxu0 0.0
    %174 = vmatpush1.msra.mxu0 0.0
    %175 = vmatprep.subr.mxu0 0.0
    %176 = vmatpush1.msra.mxu0 0.0
    %177 = vmatprep.subr.mxu0 0.0
    %178 = vmatpush1.msra.mxu0 0.0
    %179 = vmatprep.subr.mxu0 0.0
    %180 = vmatpush1.msra.mxu0 0.0
    %181 = vmatprep.subr.mxu0 0.0
    %182 = vmatpush1.msra.mxu0 0.0
    %183 = vmatprep.subr.mxu0 0.0
    %184 = vmatpush1.msra.mxu0 0.0
    %185 = vmatprep.subr.mxu0 0.0
    %186 = vmatpush1.msra.mxu0 0.0
    %187 = vmatprep.subr.mxu0 0.0
    %188 = vmatpush1.msra.mxu0 0.0
    %189 = vmatprep.subr.mxu0 0.0
    %190 = vmatpush1.msra.mxu0 0.0
    %191 = vmatprep.subr.mxu0 0.0
    %192 = vmatpush1.msra.mxu0 0.0
    %193 = vmatprep.subr.mxu0 0.0
    %194 = vmatpush1.msra.mxu0 0.0
    %195 = vmatprep.subr.mxu0 0.0
    %196 = vmatpush1.msra.mxu0 0.0
    %197 = vmatprep.subr.mxu0 0.0
    %198 = vmatpush1.msra.mxu0 0.0
    %199 = vmatprep.subr.mxu0 0.0
    %200 = vmatpush1.msra.mxu0 0.0
    %201 = vmatprep.subr.mxu0 0.0
    %202 = vmatpush1.msra.mxu0 0.0
    %203 = vmatprep.subr.mxu0 0.0
    %204 = vmatpush1.msra.mxu0 0.0
    %205 = vmatprep.mubr.f32.mxu0 0.0
    %206 = vmatmul.mubr.f32.gmra.mrb[0].mxu0 %v133
    %v207 = vpop.f32.mrb[0].mxu0
    %v208 = vadd.f32 0.0, %v207
    %v209 = vpop.f32.mrb[0].mxu0
    %210 = vmatprep.mubr.f32.mxu0 0.0
    %211 = vmatmul.mubr.f32.gmra.mrb[0].mxu0 %v136
    %v212 = vpop.f32.mrb[0].mxu0
    %v213 = vadd.f32 0.0, %v212
    %v214 = vpop.f32.mrb[0].mxu0
    %215 = vdwg.mxu0
    %v216 = vxor.u32 %v208, 2147483648
    %v217 = vxor.u32 %v213, 2147483648
    %v218 = vmul.f32 %v216, 1.442695
    %v219 = vpow.pop %v218
    %v220 = vmul.f32 %v217, 1.442695
    %v221 = vpow.pop %v220
    %v222 = vadd.f32 %v219, 1.0
    %v223 = vadd.f32 %v221, 1.0
    %v224 = vrcp.pop %v222
    %v225 = vmul.f32 1.0, %v224
    %v226 = vrcp.pop %v223
    %v227 = vmul.f32 1.0, %v226
    %vm228 = vcmask 7168
    %229 = vst.msk [vmem:[%s3] sm:$0xff] %vm228, %v225
    %vm230 = vcmask 1024
    %231 = vst.msk [vmem:[%s3 + $0x8] sm:$0x3] %vm230, %v227
    // Predicated region
    $region18: #{model_forward.1} parent=1 // pred_check
      _
    $region19: #{model_forward.1} parent=1 // pred_check_branch
      %233 = sbr.rel (0) target = $region21
    $region20: #{model_forward.1} parent=1 // pred_region
      _
    $region21: #{model_forward.1} parent=1 // pred_fallthru
      _
    // Predicated region
    $region22: #{model_forward.1} parent=1 // pred_check
      _
    $region23: #{model_forward.1} parent=1 // pred_check_branch
      %235 = sbr.rel (0) target = $region25
    $region24: #{model_forward.1} parent=1 // pred_region
      _
    $region25: #{model_forward.1} parent=1 // pred_fallthru
      _
    %236 = vsyncpa [#allocation3], 1

</llo_original>
